<compile_context>
chip_gen: v5e
topology: v5e:2x2
jax: 0.10.0
libtpu: 0.0.40
codegen_flags: <defaults>
</compile_context>

<pallas_src>
import functools

import jax
import jax.numpy as jnp
from jax import lax
from jax.experimental import pallas as pl
from jax.experimental.pallas import tpu as pltpu


def _ffn_kernel(x_ref, w1_ref, w2_ref, gamma_ref, beta_ref, o_ref, *, eps: float):
    # x_ref: (TM, D) row tile; w1_ref: (D, F); w2_ref: (F, D); gamma/beta: (1, D)
    x = x_ref[...].astype(jnp.float32)

    # Position-wise FFN: ReLU(x @ W1) @ W2   (MXU, f32 accumulation)
    h = jnp.dot(x, w1_ref[...], preferred_element_type=jnp.float32)
    h = jnp.maximum(h, 0.0)
    y = jnp.dot(h, w2_ref[...], preferred_element_type=jnp.float32)

    # Residual + LayerNorm over the feature (lane) dimension.
    z = y + x
    mean = jnp.mean(z, axis=-1, keepdims=True)
    zc = z - mean
    var = jnp.mean(zc * zc, axis=-1, keepdims=True)
    zn = zc * lax.rsqrt(var + eps)
    o_ref[...] = (zn * gamma_ref[...] + beta_ref[...]).astype(o_ref.dtype)


def poswise_ffn(x, w1, w2, gamma, beta, *, eps: float = 1e-5, tile_rows: int = 512):
    """x: [B, S, D] float; w1: [D, F]; w2: [F, D]; gamma, beta: [D]."""
    B, S, D = x.shape
    F = w1.shape[1]
    N = B * S

    # Flatten batch/seq: rows are fully independent for a position-wise FFN.
    x2 = x.reshape(N, D)

    # Row-tile size: as big as reasonable (amortizes grid-step overhead) but
    # capped so the double-buffered working set stays well inside VMEM on every
    # generation (v7x only has 64 MiB).  tile_rows=512 keeps x/out blocks at
    # 512*D*4 bytes each, plus the resident weights.
    tm = min(tile_rows, N)
    if tm < N:
        tm = max(8, (tm // 8) * 8)  # 2nd-to-last block dim must be a multiple of 8
    pad = (-N) % tm
    if pad:
        x2 = jnp.pad(x2, ((0, pad), (0, 0)))  # padded rows are dropped after the call
    n_rows = N + pad

    gamma2 = gamma.reshape(1, D)
    beta2 = beta.reshape(1, D)

    out = pl.pallas_call(
        functools.partial(_ffn_kernel, eps=eps),
        out_shape=jax.ShapeDtypeStruct((n_rows, D), x.dtype),
        grid=(n_rows // tm,),
        in_specs=[
            pl.BlockSpec((tm, D), lambda i: (i, 0)),   # x rows (streamed)
            pl.BlockSpec((D, F), lambda i: (0, 0)),    # W1 (VMEM-resident)
            pl.BlockSpec((F, D), lambda i: (0, 0)),    # W2 (VMEM-resident)
            pl.BlockSpec((1, D), lambda i: (0, 0)),    # LayerNorm gamma (resident)
            pl.BlockSpec((1, D), lambda i: (0, 0)),    # LayerNorm beta  (resident)
        ],
        out_specs=pl.BlockSpec((tm, D), lambda i: (i, 0)),
        compiler_params=pltpu.CompilerParams(
            dimension_semantics=("parallel",),  # shard row tiles across v7x's 2 TCs
        ),
    )(x2, w1, w2, gamma2, beta2)

    if pad:
        out = out[:N]
    return out.reshape(B, S, D)


if __name__ == "__main__":
    # Small deterministic demo shapes: batch=2, seq=8, d_model=32, d_ff=64.
    B, S, D, F = 2, 8, 32, 64
    key = jax.random.PRNGKey(0)
    kx, k1, k2, kg, kb = jax.random.split(key, 5)

    x = jax.random.normal(kx, (B, S, D), dtype=jnp.float32)
    w1 = 0.1 * jax.random.normal(k1, (D, F), dtype=jnp.float32)   # Linear(d_model, d_ff).weight.T
    w2 = 0.1 * jax.random.normal(k2, (F, D), dtype=jnp.float32)   # Linear(d_ff, d_model).weight.T
    gamma = 1.0 + 0.1 * jax.random.normal(kg, (D,), dtype=jnp.float32)
    beta = 0.1 * jax.random.normal(kb, (D,), dtype=jnp.float32)

    out = poswise_ffn(x, w1, w2, gamma, beta)
    out = jax.block_until_ready(out)

    # Pure-JAX reference (same math as the PyTorch module's forward).
    x2 = x.reshape(-1, D)
    h = jnp.maximum(x2 @ w1, 0.0)
    z = h @ w2 + x2
    mean = z.mean(-1, keepdims=True)
    var = ((z - mean) ** 2).mean(-1, keepdims=True)
    ref = ((z - mean) / jnp.sqrt(var + 1e-5) * gamma + beta).reshape(B, S, D)

    assert out.shape == (B, S, D)
    assert jnp.allclose(out, ref, atol=2e-3, rtol=2e-3), (
        f"mismatch vs reference, max abs err = {jnp.max(jnp.abs(out - ref))}"
    )
    print("KERNEL_OK")
</pallas_src>

<mosaic_0001>
module attributes {stable_mosaic.version = 11 : i64} {
  func.func @_ffn_kernel(%arg0: i32, %arg1: memref<16x32xf32, #tpu.memory_space<vmem>>, %arg2: memref<32x64xf32, #tpu.memory_space<vmem>>, %arg3: memref<64x32xf32, #tpu.memory_space<vmem>>, %arg4: memref<1x32xf32, #tpu.memory_space<vmem>>, %arg5: memref<1x32xf32, #tpu.memory_space<vmem>>, %arg6: memref<16x32xf32, #tpu.memory_space<vmem>>) attributes {dimension_semantics = [#tpu.dimension_semantics<parallel>], iteration_bounds = array<i64: 1>, scalar_prefetch = 0 : i64, scratch_operands = 0 : i64, tpu.core_type = #tpu.core_type<tc>, window_params = [{transform_indices = @transform_0, window_bounds = array<i64: 16, 32>}, {pipeline_mode = #tpu.pipeline_mode<synchronous>, transform_indices = @transform_1, window_bounds = array<i64: 32, 64>}, {pipeline_mode = #tpu.pipeline_mode<synchronous>, transform_indices = @transform_2, window_bounds = array<i64: 64, 32>}, {pipeline_mode = #tpu.pipeline_mode<synchronous>, transform_indices = @transform_3, window_bounds = array<i64: 1, 32>}, {pipeline_mode = #tpu.pipeline_mode<synchronous>, transform_indices = @transform_4, window_bounds = array<i64: 1, 32>}, {transform_indices = @transform_5, window_bounds = array<i64: 16, 32>}]} {
    %c0 = arith.constant 0 : index
    %c0_0 = arith.constant 0 : index
    %0 = vector.load %arg1[%c0, %c0_0] : memref<16x32xf32, #tpu.memory_space<vmem>>, vector<16x32xf32>
    %c0_1 = arith.constant 0 : index
    %c0_2 = arith.constant 0 : index
    %1 = vector.load %arg2[%c0_1, %c0_2] : memref<32x64xf32, #tpu.memory_space<vmem>>, vector<32x64xf32>
    %cst = arith.constant dense<0.000000e+00> : vector<16x64xf32>
    %2 = tpu.matmul %0, %1, %cst {dimension_numbers = #tpu.dot_dimension_numbers<[1], [0], [0], [1], [0, 0, 1, 1], [], []>} : vector<16x32xf32>, vector<32x64xf32>, vector<16x64xf32> -> vector<16x64xf32>
    %cst_3 = arith.constant 0.000000e+00 : f32
    %3 = vector.broadcast %cst_3 : f32 to vector<16x64xf32>
    %4 = arith.maximumf %2, %3 : vector<16x64xf32>
    %c0_4 = arith.constant 0 : index
    %c0_5 = arith.constant 0 : index
    %5 = vector.load %arg3[%c0_4, %c0_5] : memref<64x32xf32, #tpu.memory_space<vmem>>, vector<64x32xf32>
    %cst_6 = arith.constant dense<0.000000e+00> : vector<16x32xf32>
    %6 = tpu.matmul %4, %5, %cst_6 {dimension_numbers = #tpu.dot_dimension_numbers<[1], [0], [0], [1], [0, 0, 1, 1], [], []>} : vector<16x64xf32>, vector<64x32xf32>, vector<16x32xf32> -> vector<16x32xf32>
    %7 = arith.addf %6, %0 : vector<16x32xf32>
    %cst_7 = arith.constant dense<0.000000e+00> : vector<16xf32>
    %8 = vector.multi_reduction <add>, %7, %cst_7 [1] : vector<16x32xf32> to vector<16xf32>
    %9 = vector.shape_cast %8 : vector<16xf32> to vector<16x1xf32>
    %cst_8 = arith.constant 3.200000e+01 : f32
    %10 = vector.broadcast %cst_8 : f32 to vector<16x1xf32>
    %11 = arith.divf %9, %10 : vector<16x1xf32>
    %12 = vector.broadcast %11 : vector<16x1xf32> to vector<16x32xf32>
    %13 = arith.subf %7, %12 : vector<16x32xf32>
    %14 = arith.mulf %13, %13 : vector<16x32xf32>
    %cst_9 = arith.constant dense<0.000000e+00> : vector<16xf32>
    %15 = vector.multi_reduction <add>, %14, %cst_9 [1] : vector<16x32xf32> to vector<16xf32>
    %16 = vector.shape_cast %15 : vector<16xf32> to vector<16x1xf32>
    %cst_10 = arith.constant 3.200000e+01 : f32
    %17 = vector.broadcast %cst_10 : f32 to vector<16x1xf32>
    %18 = arith.divf %16, %17 : vector<16x1xf32>
    %cst_11 = arith.constant 9.99999974E-6 : f32
    %19 = vector.broadcast %cst_11 : f32 to vector<16x1xf32>
    %20 = arith.addf %18, %19 : vector<16x1xf32>
    %21 = math.rsqrt %20 : vector<16x1xf32>
    %22 = vector.broadcast %21 : vector<16x1xf32> to vector<16x32xf32>
    %23 = arith.mulf %13, %22 : vector<16x32xf32>
    %c0_12 = arith.constant 0 : index
    %c0_13 = arith.constant 0 : index
    %24 = vector.load %arg4[%c0_12, %c0_13] : memref<1x32xf32, #tpu.memory_space<vmem>>, vector<1x32xf32>
    %25 = vector.broadcast %24 : vector<1x32xf32> to vector<16x32xf32>
    %26 = arith.mulf %23, %25 : vector<16x32xf32>
    %c0_14 = arith.constant 0 : index
    %c0_15 = arith.constant 0 : index
    %27 = vector.load %arg5[%c0_14, %c0_15] : memref<1x32xf32, #tpu.memory_space<vmem>>, vector<1x32xf32>
    %28 = vector.broadcast %27 : vector<1x32xf32> to vector<16x32xf32>
    %29 = arith.addf %26, %28 : vector<16x32xf32>
    %c0_16 = arith.constant 0 : index
    %c0_17 = arith.constant 0 : index
    %30 = vector.load %arg6[%c0_16, %c0_17] : memref<16x32xf32, #tpu.memory_space<vmem>>, vector<16x32xf32>
    tpu.vector_store %arg6[%c0_16, %c0_17], %29 {strides = array<i32>} : memref<16x32xf32, #tpu.memory_space<vmem>>, vector<16x32xf32>,
    return
  }
  func.func @transform_0(%arg0: i32) -> (i32, i32) {
    %c0_i32 = arith.constant 0 : i32
    %c0_i32_0 = arith.constant 0 : i32
    return %arg0, %c0_i32 : i32, i32
  }
  func.func @transform_1(%arg0: i32) -> (i32, i32) {
    %c0_i32 = arith.constant 0 : i32
    %c0_i32_0 = arith.constant 0 : i32
    %c0_i32_1 = arith.constant 0 : i32
    return %c0_i32, %c0_i32_0 : i32, i32
  }
  func.func @transform_2(%arg0: i32) -> (i32, i32) {
    %c0_i32 = arith.constant 0 : i32
    %c0_i32_0 = arith.constant 0 : i32
    %c0_i32_1 = arith.constant 0 : i32
    return %c0_i32, %c0_i32_0 : i32, i32
  }
  func.func @transform_3(%arg0: i32) -> (i32, i32) {
    %c0_i32 = arith.constant 0 : i32
    %c0_i32_0 = arith.constant 0 : i32
    %c0_i32_1 = arith.constant 0 : i32
    return %c0_i32, %c0_i32_0 : i32, i32
  }
  func.func @transform_4(%arg0: i32) -> (i32, i32) {
    %c0_i32 = arith.constant 0 : i32
    %c0_i32_0 = arith.constant 0 : i32
    %c0_i32_1 = arith.constant 0 : i32
    return %c0_i32, %c0_i32_0 : i32, i32
  }
  func.func @transform_5(%arg0: i32) -> (i32, i32) {
    %c0_i32 = arith.constant 0 : i32
    %c0_i32_0 = arith.constant 0 : i32
    return %arg0, %c0_i32 : i32, i32
  }
}

</mosaic_0001>

<llo_original>
// kernel: tpu_custom_call.1
$region0: #{tpu_custom_call.1}
  #allocation0 [shape = 'u32[]', space=smem, size = 0x4, offset = 0x4, fixed_abs, tag = 'smem constant byte address 0x4 - core index']
  #allocation1 [shape = 'u32[72,128]{1,0:T(1,128)}', space=vmem, size = 0x9000, scoped, tag = 'internal scratch']
  %s0 = inlined_call_operand.vmem [shape: f32[16,32], index: 0, kind: input, shape index: {}]
  %s1 = inlined_call_operand.vmem [shape: f32[32,64], index: 1, kind: input, shape index: {}]
  %s2 = inlined_call_operand.vmem [shape: f32[64,32], index: 2, kind: input, shape index: {}]
  %s3 = inlined_call_operand.vmem [shape: f32[1,32], index: 3, kind: input, shape index: {}]
  %s4 = inlined_call_operand.vmem [shape: f32[1,32], index: 4, kind: input, shape index: {}]
  %s5 = inlined_call_operand.hbm [shape: f32[16,32], index: 5, kind: output, shape index: {}]
  %s6 = sld [smem:[#allocation0]]
  $region30: #{tpu_custom_call.1} parent=0
    _
  %s8 = ssub.s32 1, %s6
  %s9 = scalar_select 0, %s8, %s6
  $region1: #{tpu_custom_call.1} parent=0
    #allocation2 [shape = 'u8[8192]{0}', space=vmem, size = 0x2000, scoped, tag = 'output window, operand 0, single buffered']
    #allocation3 [shape = 's32[1]{0}', space=sflag, size = 0x4, scoped, tag = 'scoped memory for tpu_custom_call.1']
    %10 = vsyncpa [#allocation3], 0
    // Predicated region
    $region2: #{tpu_custom_call.1} parent=1 // pred_check
      _
    $region3: #{tpu_custom_call.1} parent=1 // pred_check_branch
      %12 = sbr.rel (0) target = $region5
    $region4: #{tpu_custom_call.1} parent=1 // pred_region
      _
    $region5: #{tpu_custom_call.1} parent=1 // pred_fallthru
      _
    // Predicated region
    $region6: #{tpu_custom_call.1} parent=1 // pred_check
      _
    $region7: #{tpu_custom_call.1} parent=1 // pred_check_branch
      %14 = sbr.rel (0) target = $region9
    $region8: #{tpu_custom_call.1} parent=1 // pred_region
      _
    $region9: #{tpu_custom_call.1} parent=1 // pred_fallthru
      _
    // Predicated region
    $region10: #{tpu_custom_call.1} parent=1 // pred_check
      _
    $region11: #{tpu_custom_call.1} parent=1 // pred_check_branch
      %16 = sbr.rel (0) target = $region13
    $region12: #{tpu_custom_call.1} parent=1 // pred_region
      _
    $region13: #{tpu_custom_call.1} parent=1 // pred_fallthru
      _
    // Predicated region
    $region14: #{tpu_custom_call.1} parent=1 // pred_check
      _
    $region15: #{tpu_custom_call.1} parent=1 // pred_check_branch
      %18 = sbr.rel (0) target = $region17
    $region16: #{tpu_custom_call.1} parent=1 // pred_region
      _
    $region17: #{tpu_custom_call.1} parent=1 // pred_fallthru
      _
    // Predicated region
    $region18: #{tpu_custom_call.1} parent=1 // pred_check
      _
    $region19: #{tpu_custom_call.1} parent=1 // pred_check_branch
      %20 = sbr.rel (0) target = $region21
    $region20: #{tpu_custom_call.1} parent=1 // pred_region
      _
    $region21: #{tpu_custom_call.1} parent=1 // pred_fallthru
      _
    %v21 = vld [vmem:[%s0] sm:$0xff]
    %v22 = vld [vmem:[%s0 + $0x8] sm:$0xff]
    %v23 = vld [vmem:[%s1] sm:$0xff]
    %v24 = vld [vmem:[%s1 + $0x8] sm:$0xff]
    %v25 = vld [vmem:[%s1 + $0x10] sm:$0xff]
    %v26 = vld [vmem:[%s1 + $0x18] sm:$0xff]
    %vm27 = vcmask 261120
    %v29 = vsel %vm27, %v21, 0
    %v32 = vsel %vm27, %v22, 0
    %34 = vmatpush.msra.mxu0 0.0
    %35 = vmatpush.msra.mxu0 0.0
    %36 = vmatpush.msra.mxu0 0.0
    %37 = vmatpush.msra.mxu0 0.0
    %38 = vmatpush.msra.mxu0 0.0
    %39 = vmatpush.msra.mxu0 0.0
    %40 = vmatpush.msra.mxu0 0.0
    %41 = vmatpush.msra.mxu0 0.0
    %42 = vmatpush.msra.mxu0 0.0
    %43 = vmatpush.msra.mxu0 0.0
    %44 = vmatpush.msra.mxu0 0.0
    %45 = vmatpush.msra.mxu0 0.0
    %46 = vmatpush.msra.mxu0 %v26
    %47 = vmatpush.msra.mxu0 %v25
    %48 = vmatpush.msra.mxu0 %v24
    %49 = vmatpush.msra.mxu0 %v23
    %50 = vmatmul.f32.gmra.mxu0 %v29
    %v51 = vpop.f32.mrf.mxu0
    %v52 = vadd.f32 0.0, %v51
    %53 = vmatmul.f32.gmra.mxu0 %v32
    %v54 = vpop.f32.mrf.mxu0
    %v55 = vadd.f32 0.0, %v54
    %56 = vdwg.mxu0
    %v57 = vmax.f32 %v52, 0.0
    %v58 = vmax.f32 %v55, 0.0
    %v59 = vld [vmem:[%s2] sm:$0xff]
    %v60 = vld [vmem:[%s2 + $0x8] sm:$0xff]
    %v61 = vld [vmem:[%s2 + $0x10] sm:$0xff]
    %v62 = vld [vmem:[%s2 + $0x18] sm:$0xff]
    %v63 = vld [vmem:[%s2 + $0x20] sm:$0xff]
    %v64 = vld [vmem:[%s2 + $0x28] sm:$0xff]
    %v65 = vld [vmem:[%s2 + $0x30] sm:$0xff]
    %v66 = vld [vmem:[%s2 + $0x38] sm:$0xff]
    %vm67 = vcmask 523264
    %v69 = vsel %vm67, %v57, 0
    %v72 = vsel %vm67, %v58, 0
    %74 = vmatpush.msra.mxu0 0.0
    %75 = vmatpush.msra.mxu0 0.0
    %76 = vmatpush.msra.mxu0 0.0
    %77 = vmatpush.msra.mxu0 0.0
    %78 = vmatpush.msra.mxu0 0.0
    %79 = vmatpush.msra.mxu0 0.0
    %80 = vmatpush.msra.mxu0 0.0
    %81 = vmatpush.msra.mxu0 0.0
    %82 = vmatpush.msra.mxu0 %v66
    %83 = vmatpush.msra.mxu0 %v65
    %84 = vmatpush.msra.mxu0 %v64
    %85 = vmatpush.msra.mxu0 %v63
    %86 = vmatpush.msra.mxu0 %v62
    %87 = vmatpush.msra.mxu0 %v61
    %88 = vmatpush.msra.mxu0 %v60
    %89 = vmatpush.msra.mxu0 %v59
    %90 = vmatmul.f32.gmra.mxu0 %v69
    %v91 = vpop.f32.mrf.mxu0
    %v92 = vadd.f32 %v21, %v91
    %93 = vmatmul.f32.gmra.mxu0 %v72
    %v94 = vpop.f32.mrf.mxu0
    %v95 = vadd.f32 %v22, %v94
    %96 = vdwg.mxu0
    %v97 = vsel %vm27, %v92, 0.0
    %98 = vadd.xlane.f32.xlu0 %v97
    %v99 = vpop.xlane.xlu0 %98
    %v100 = vsel %vm27, %v95, 0.0
    %101 = vadd.xlane.f32.xlu0 %v100
    %v102 = vpop.xlane.xlu0 %101
    %v103 = vrcp.pop 32.0
    %v104 = vmul.f32 32.0, %v103
    %v105 = vsub.f32 1.0, %v104
    %v106 = vmul.f32 %v103, %v105
    %v107 = vadd.f32 %v103, %v106
    %vm108 = vweird.f32 %v103
    %v109 = vsel %vm108, %v103, %v107
    %v110 = vmul.f32 %v99, %v109
    %v111 = vmul.f32 %v102, %v109
    %v112 = vsub.f32 %v92, %v110
    %v113 = vsub.f32 %v95, %v111
    %v114 = vmul.f32 %v112, %v112
    %v115 = vmul.f32 %v113, %v113
    %v116 = vsel %vm27, %v114, 0.0
    %117 = vadd.xlane.f32.xlu0 %v116
    %v118 = vpop.xlane.xlu0 %117
    %v119 = vsel %vm27, %v115, 0.0
    %120 = vadd.xlane.f32.xlu0 %v119
    %v121 = vpop.xlane.xlu0 %120
    %v122 = vmul.f32 %v118, %v109
    %v123 = vmul.f32 %v121, %v109
    %v124 = vadd.f32 %v122, 1e-05
    %v125 = vadd.f32 %v123, 1e-05
    %v126 = vrsqrt.pop %v124
    %v127 = vmul.f32 %v126, %v124
    %v128 = vmul.f32 %v127, %v126
    %v129 = vmul.f32 0.5, %v128
    %v130 = vsub.f32 1.5, %v129
    %v131 = vmul.f32 %v126, %v130
    %vm132 = vweird.f32 %v124
    %vm133 = vweird.f32 %v126
    %vm134 = vmor %vm132, %vm133
    %v135 = vsel %vm134, %v126, %v131
    %v136 = vrsqrt.pop %v125
    %v137 = vmul.f32 %v136, %v125
    %v138 = vmul.f32 %v137, %v136
    %v139 = vmul.f32 0.5, %v138
    %v140 = vsub.f32 1.5, %v139
    %v141 = vmul.f32 %v136, %v140
    %vm142 = vweird.f32 %v125
    %vm143 = vweird.f32 %v136
    %vm144 = vmor %vm142, %vm143
    %v145 = vsel %vm144, %v136, %v141
    %v146 = vmul.f32 %v112, %v135
    %v147 = vmul.f32 %v113, %v145
    %v148 = vld [vmem:[%s3] sm:$0x1]
    %v150 = vperm.slane %v148, 0
    %v152 = vmul.f32 %v146, %v150
    %v153 = vmul.f32 %v147, %v150
    %v154 = vld [vmem:[%s4] sm:$0x1]
    %v156 = vperm.slane %v154, 0
    %v158 = vadd.f32 %v152, %v156
    %v159 = vadd.f32 %v153, %v156
    %160 = vst.msk [vmem:[#allocation2] sm:$0xff] %vm27, %v158
    %161 = vst.msk [vmem:[#allocation2 + $0x8] sm:$0xff] %vm27, %v159
    // Predicated region
    $region22: #{tpu_custom_call.1} parent=1 // pred_check
      _
    $region23: #{tpu_custom_call.1} parent=1 // pred_check_branch
      %163 = sbr.rel (0) target = $region25
    $region24: #{tpu_custom_call.1} parent=1 // pred_region
      %165 = vsyncadd [#allocation3], 0
      %s166 = sshll.u32 [#allocation2], 4
      %s167 = int_to_ptr.vmem [resolvable:$true] %s166
      %s168 = sshll.u32 %s5, 4
      %s169 = int_to_ptr.hbm [resolvable:$true] %s168
      %174 = dma.vmem_to_hbm [thread:$0]  %s167, 256, %s169, [#allocation3], 128, 128, 8
    $region25: #{tpu_custom_call.1} parent=1 // pred_fallthru
      _
    // Predicated region
    $region26: #{tpu_custom_call.1} parent=1 // pred_check
      _
    $region27: #{tpu_custom_call.1} parent=1 // pred_check_branch
      %176 = sbr.rel (0) target = $region29
    $region28: #{tpu_custom_call.1} parent=1 // pred_region
      %178 = dma.done [#allocation3], 256
    $region29: #{tpu_custom_call.1} parent=1 // pred_fallthru
      _
    %179 = vsyncpa [#allocation3], 1

</llo_original>
